<compile_context>
chip_gen: v7x
topology: tpu7x:2x2x1
jax: 0.10.0
libtpu: 0.0.40
codegen_flags: <defaults>
</compile_context>

<pallas_src>
import functools
import math

import jax
import jax.numpy as jnp
from jax import lax
from jax.experimental import pallas as pl
from jax.experimental.pallas import tpu as pltpu


# ----------------------------------------------------------------------------
# Kernel:  out = x + pe   with pe recomputed in-kernel (no pe HBM read).
# ----------------------------------------------------------------------------
def _pos_encoding_kernel(x_ref, inv_freq_ref, o_ref, *, row_block):
    # x_ref      : (row_block, B*D) block of the activations (lane-dense)
    # inv_freq_ref: (1, B*D) grid-invariant row: exp(-(2*(d//2))*ln(10000)/D),
    #               already tiled over the batch dim.
    ts, w = x_ref.shape
    start = pl.program_id(0) * row_block                       # first seq row of block

    # Sequence position of every element of the block.
    pos = (lax.broadcasted_iota(jnp.int32, (ts, w), 0) + start).astype(jnp.float32)
    angle = pos * inv_freq_ref[...]                            # (ts,w) * (1,w) broadcast

    # Even feature index -> sin, odd -> cos (d_model is even, so the parity of
    # the flattened column equals the parity of the feature index d).
    col = lax.broadcasted_iota(jnp.int32, (ts, w), 1)
    pe = jnp.where(col % 2 == 0, jnp.sin(angle), jnp.cos(angle))

    # Add in f32 regardless of I/O dtype; store back in the I/O dtype.
    o_ref[...] = (x_ref[...].astype(jnp.float32) + pe).astype(o_ref.dtype)


# ----------------------------------------------------------------------------
# Wrapper
# ----------------------------------------------------------------------------
def _inv_freq_row(d_model, batch):
    """(1, batch*d_model) row of div_term values, matching the PyTorch buffer."""
    d = jnp.arange(d_model, dtype=jnp.int32)
    exponent = ((d // 2) * 2).astype(jnp.float32)
    inv = jnp.exp(exponent * (-math.log(10000.0) / d_model))   # (d_model,)
    return jnp.tile(inv, (batch,)).reshape(1, batch * d_model)


def _pick_row_block(seq_len, width, itemsize, vmem_budget_bytes):
    # Per grid step the pipeline holds 2 buffers each for the x block and the
    # output block: 4 * ts * width * itemsize bytes (pe is computed in-kernel).
    per_row = 4 * width * itemsize
    ts = max(vmem_budget_bytes // per_row, 8)
    if seq_len >= 16:
        # >= 2 grid steps so both v7x TensorCores get rows (no-op on v5e/v6e).
        ts = min(ts, pl.cdiv(seq_len, 2))
    ts = min(ts, seq_len)
    if ts > 8:
        ts = (ts // 8) * 8        # keep the sublane dim a multiple of 8
    return int(ts)


def positional_encoding(x, *, max_len=512, vmem_budget_bytes=8 * 1024 * 1024):
    """PositionalEncoding.forward (eval): x + pe[:S], dropout == identity.

    x: (S, B, d_model), any float dtype (f32 or bf16); output has x.dtype.
    """
    S, B, D = x.shape
    assert D % 2 == 0, "d_model must be even (as in the PyTorch module)"
    assert S <= max_len, "sequence longer than the module's max_len"

    w = B * D
    ts = _pick_row_block(S, w, jnp.dtype(x.dtype).itemsize, vmem_budget_bytes)
    grid = (pl.cdiv(S, ts),)

    x2 = x.reshape(S, w)               # contiguous view: lane axis = B*d_model
    inv_freq = _inv_freq_row(D, B)     # tiny, grid-invariant

    out2 = pl.pallas_call(
        functools.partial(_pos_encoding_kernel, row_block=ts),
        grid=grid,
        in_specs=[
            pl.BlockSpec((ts, w), lambda i: (i, 0)),   # x sequence-row blocks
            pl.BlockSpec((1, w), lambda i: (0, 0)),    # resident inverse freqs
        ],
        out_specs=pl.BlockSpec((ts, w), lambda i: (i, 0)),
        out_shape=jax.ShapeDtypeStruct((S, w), x.dtype),
        compiler_params=pltpu.CompilerParams(
            dimension_semantics=("parallel",),
            vmem_limit_bytes=32 * 1024 * 1024,
        ),
    )(x2, inv_freq)

    return out2.reshape(S, B, D)


# ----------------------------------------------------------------------------
if __name__ == "__main__":
    # Small shapes implied by the module: (seq, batch, d_model)
    S, B, D = 8, 2, 32
    max_len = 512

    key = jax.random.PRNGKey(0)
    x = jax.random.normal(key, (S, B, D), dtype=jnp.float32)

    out = jax.block_until_ready(positional_encoding(x, max_len=max_len))

    # Reference: build the pe buffer exactly like the PyTorch __init__, then
    # apply the eval-mode forward  x + pe[:S].
    position = jnp.arange(max_len, dtype=jnp.float32)[:, None]
    div_term = jnp.exp(jnp.arange(0, D, 2, dtype=jnp.float32)
                       * (-math.log(10000.0) / D))
    pe = jnp.zeros((max_len, D), jnp.float32)
    pe = pe.at[:, 0::2].set(jnp.sin(position * div_term))
    pe = pe.at[:, 1::2].set(jnp.cos(position * div_term))
    ref = x + pe[:S][:, None, :]

    assert out.shape == (S, B, D), out.shape
    assert bool(jnp.all(jnp.isfinite(out)))
    assert bool(jnp.allclose(out, ref, atol=1e-5, rtol=1e-5))
    print("KERNEL_OK")
</pallas_src>

<mosaic_0001>
module attributes {stable_mosaic.version = 11 : i64} {
  func.func @_pos_encoding_kernel(%arg0: i32, %arg1: memref<8x64xf32, #tpu.memory_space<vmem>>, %arg2: memref<1x64xf32, #tpu.memory_space<vmem>>, %arg3: memref<8x64xf32, #tpu.memory_space<vmem>>) attributes {dimension_semantics = [#tpu.dimension_semantics<parallel>], iteration_bounds = array<i64: 1>, scalar_prefetch = 0 : i64, scratch_operands = 0 : i64, tpu.core_type = #tpu.core_type<tc>, window_params = [{transform_indices = @transform_0, window_bounds = array<i64: 8, 64>}, {pipeline_mode = #tpu.pipeline_mode<synchronous>, transform_indices = @transform_1, window_bounds = array<i64: 1, 64>}, {transform_indices = @transform_2, window_bounds = array<i64: 8, 64>}]} {
    %c8_i32 = arith.constant 8 : i32
    %0 = arith.muli %arg0, %c8_i32 : i32
    %1 = tpu.iota {dimensions = array<i32: 0>} : vector<8x64xi32>
    %2 = vector.broadcast %0 : i32 to vector<8x64xi32>
    %3 = arith.addi %1, %2 : vector<8x64xi32>
    %4 = arith.sitofp %3 : vector<8x64xi32> to vector<8x64xf32>
    %c0 = arith.constant 0 : index
    %c0_0 = arith.constant 0 : index
    %5 = vector.load %arg2[%c0, %c0_0] : memref<1x64xf32, #tpu.memory_space<vmem>>, vector<1x64xf32>
    %6 = vector.broadcast %5 : vector<1x64xf32> to vector<8x64xf32>
    %7 = arith.mulf %4, %6 : vector<8x64xf32>
    %8 = tpu.iota {dimensions = array<i32: 1>} : vector<8x64xi32>
    %c2_i32 = arith.constant 2 : i32
    %c0_i32 = arith.constant 0 : i32
    %9 = arith.cmpi eq, %c2_i32, %c0_i32 : i32
    %c1_i32 = arith.constant 1 : i32
    %10 = arith.select %9, %c1_i32, %c2_i32 : i32
    %11 = vector.broadcast %10 : i32 to vector<8x64xi32>
    %12 = arith.remsi %8, %11 : vector<8x64xi32>
    %c0_i32_1 = arith.constant 0 : i32
    %13 = vector.broadcast %c0_i32_1 : i32 to vector<8x64xi32>
    %14 = arith.cmpi ne, %12, %13 : vector<8x64xi32>
    %c0_i32_2 = arith.constant 0 : i32
    %15 = vector.broadcast %c0_i32_2 : i32 to vector<8x64xi32>
    %16 = arith.cmpi slt, %12, %15 : vector<8x64xi32>
    %c0_i32_3 = arith.constant 0 : i32
    %17 = arith.cmpi slt, %10, %c0_i32_3 : i32
    %18 = vector.broadcast %17 : i1 to vector<8x64xi1>
    %19 = vector.broadcast %18 : vector<8x64xi1> to vector<8x64xi1>
    %20 = arith.xori %16, %19 : vector<8x64xi1>
    %21 = arith.andi %20, %14 : vector<8x64xi1>
    %22 = vector.broadcast %10 : i32 to vector<8x64xi32>
    %23 = arith.addi %12, %22 : vector<8x64xi32>
    %24 = arith.select %21, %23, %12 : vector<8x64xi1>, vector<8x64xi32>
    %c0_i32_4 = arith.constant 0 : i32
    %25 = vector.broadcast %c0_i32_4 : i32 to vector<8x64xi32>
    %26 = arith.cmpi eq, %24, %25 : vector<8x64xi32>
    %27 = math.sin %7 : vector<8x64xf32>
    %28 = math.cos %7 : vector<8x64xf32>
    %29 = arith.select %26, %27, %28 : vector<8x64xi1>, vector<8x64xf32>
    %c0_5 = arith.constant 0 : index
    %c0_6 = arith.constant 0 : index
    %30 = vector.load %arg1[%c0_5, %c0_6] : memref<8x64xf32, #tpu.memory_space<vmem>>, vector<8x64xf32>
    %31 = arith.addf %30, %29 : vector<8x64xf32>
    %c0_7 = arith.constant 0 : index
    %c0_8 = arith.constant 0 : index
    %32 = vector.load %arg3[%c0_7, %c0_8] : memref<8x64xf32, #tpu.memory_space<vmem>>, vector<8x64xf32>
    tpu.vector_store %arg3[%c0_7, %c0_8], %31 {strides = array<i32>} : memref<8x64xf32, #tpu.memory_space<vmem>>, vector<8x64xf32>,
    return
  }
  func.func @transform_0(%arg0: i32) -> (i32, i32) {
    %c0_i32 = arith.constant 0 : i32
    %c0_i32_0 = arith.constant 0 : i32
    return %arg0, %c0_i32 : i32, i32
  }
  func.func @transform_1(%arg0: i32) -> (i32, i32) {
    %c0_i32 = arith.constant 0 : i32
    %c0_i32_0 = arith.constant 0 : i32
    %c0_i32_1 = arith.constant 0 : i32
    return %c0_i32, %c0_i32_0 : i32, i32
  }
  func.func @transform_2(%arg0: i32) -> (i32, i32) {
    %c0_i32 = arith.constant 0 : i32
    %c0_i32_0 = arith.constant 0 : i32
    return %arg0, %c0_i32 : i32, i32
  }
}

</mosaic_0001>

<llo_original>
// kernel: tpu_custom_call.1
$region0: #{tpu_custom_call.1}
  #allocation0 [shape = 'u32[]', space=smem, size = 0x4, offset = 0x4, fixed_abs, tag = 'smem constant byte address 0x4 - core index']
  #allocation1 [shape = 'u32[144,128]{1,0:T(1,128)}', space=vmem, size = 0x12000, scoped, tag = 'internal scratch']
  %s0 = inlined_call_operand.hbm [shape: f32[8,64], index: 0, kind: input, shape index: {}]
  %s1 = inlined_call_operand.vmem [shape: f32[1,64], index: 1, kind: input, shape index: {}]
  %s2 = inlined_call_operand.hbm [shape: f32[8,64], index: 2, kind: output, shape index: {}]
  %s3 = sld [smem:[#allocation0]]
  $region22: #{tpu_custom_call.1} parent=0
    _
  %s5 = ssub.s32 1, %s3
  %s6 = scalar_select 0, %s5, %s3
  $region1: #{tpu_custom_call.1} parent=0
    #allocation2 [shape = 'u8[4096]{0}', space=vmem, size = 0x1000, scoped, tag = 'input window, operand 0, single buffered']
    #allocation3 [shape = 's32[1]{0}', space=sflag, size = 0x4, scoped, tag = 'scoped memory for tpu_custom_call.1']
    #allocation4 [shape = 's32[1]{0}', space=sflag, size = 0x4, scoped, tag = 'scoped memory for tpu_custom_call.1']
    #allocation5 [shape = 'u8[4096]{0}', space=vmem, size = 0x1000, scoped, tag = 'output window, operand 0, single buffered']
    %7 = vsyncpa [#allocation3], 0
    %8 = vsyncpa [#allocation4], 0
    // Predicated region
    $region2: #{tpu_custom_call.1} parent=1 // pred_check
      _
    $region3: #{tpu_custom_call.1} parent=1 // pred_check_branch
      %10 = sbr.rel (0) target = $region5
    $region4: #{tpu_custom_call.1} parent=1 // pred_region
      %s12 = ssub.s32 128, 128
      %13 = vsyncadd [#allocation3], %s12
      %s15 = sshll.u32 [#allocation2], 4
      %s16 = int_to_ptr.vmem [resolvable:$true] %s15
      %18 = dma.hbm_to_vmem [thread:$0]  %s0, 128, %s16, [#allocation3]
    $region5: #{tpu_custom_call.1} parent=1 // pred_fallthru
      _
    // Predicated region
    $region6: #{tpu_custom_call.1} parent=1 // pred_check
      _
    $region7: #{tpu_custom_call.1} parent=1 // pred_check_branch
      %20 = sbr.rel (0) target = $region9
    $region8: #{tpu_custom_call.1} parent=1 // pred_region
      _
    $region9: #{tpu_custom_call.1} parent=1 // pred_fallthru
      _
    // Predicated region
    $region10: #{tpu_custom_call.1} parent=1 // pred_check
      _
    $region11: #{tpu_custom_call.1} parent=1 // pred_check_branch
      %22 = sbr.rel (0) target = $region13
    $region12: #{tpu_custom_call.1} parent=1 // pred_region
      %23 = dma.done [#allocation3], 128
    $region13: #{tpu_custom_call.1} parent=1 // pred_fallthru
      _
    %s24 = smul.u32 0, 8
    %v25 = vlaneseq
    %v26 = vshrl.u32 %v25, 7
    %v27 = vstv %s24
    %v28 = vadd.s32 %v26, %v27
    %v29 = vcvt.s32.f32 %v28
    %v30 = vld [vmem:[%s1] sm:$0x1]
    %v32 = vlaneseq
    %v33 = vshrl.u32 %v32, 7
    %v34 = vsub.s32 0, %v33
    %v35 = vrot.slane %v30, %v34
    %v37 = vmul.f32 %v29, %v35
    %v38 = vlaneseq
    %v39 = vand.u32 %v38, 127
    %vm40 = vcmp.lt.s32.totalorder %v39, 0
    %v41 = vsub.s32 0, %v39
    %v42 = vsel %vm40, %v41, %v39
    %v43 = vshrl.u32 %v42, 1
    %v44 = vand.u32 %v42, 1
    %v45 = vsub.s32 0, %v44
    %v46 = vsel %vm40, %v45, %v44
    %vm47 = vcmp.ne.s32.totalorder %v46, 0
    %vm48 = vcmp.lt.s32.totalorder %v46, 0
    %vm49 = vmand %vm48, %vm47
    %v50 = vadd.s32 %v46, 2
    %v51 = vsel %vm49, %v50, %v46
    %vm52 = vcmp.eq.s32.totalorder %v51, 0
    %v53 = vand.u32 2147483647, %v37
    %vm54 = vcmp.le.f32.partialorder %v53, 0.7853982
    %vm55 = vcmp.lt.s32.totalorder %v37, 0
    %v56 = vand.u32 %v37, 2139095040
    %v57 = vshrl.u32 %v56, 23
    %v58 = vsub.s32 %v57, 127
    %v59 = vand.u32 2147483647, %v37
    %v60 = vand.u32 %v59, 8388607
    %v61 = vor.u32 %v60, 8388608
    %v62 = vsub.s32 0, %v61
    %v63 = vadd.s32 %v58, 1
    %vm64 = vcmp.gt.s32.totalorder %v63, 0
    %v65 = vsel %vm64, %v63, 0
    %v66 = vshrl.u32 %v65, 5
    %v67 = vand.u32 %v65, 31
    %v68 = vsub.s32 32, %v67
    %v69 = vshrl.u32 683565275, %v68
    %v70 = vshll.u32 683565275, %v67
    %v71 = vshrl.u32 2475754826, %v68
    %v72 = vor.u32 %v70, %v71
    %v73 = vshll.u32 2475754826, %v67
    %v74 = vshrl.u32 2131351028, %v68
    %v75 = vor.u32 %v73, %v74
    %v76 = vshll.u32 2131351028, %v67
    %v77 = vshrl.u32 2102212464, %v68
    %v78 = vor.u32 %v76, %v77
    %v79 = vshll.u32 2102212464, %v67
    %v80 = vshrl.u32 920167782, %v68
    %v81 = vor.u32 %v79, %v80
    %v82 = vshll.u32 920167782, %v67
    %v83 = vshrl.u32 1326507024, %v68
    %v84 = vor.u32 %v82, %v83
    %vm85 = vcmp.lt.s32.totalorder %v66, 1
    %vm86 = vcmp.lt.s32.totalorder %v66, 2
    %vm87 = vcmp.lt.s32.totalorder %v66, 3
    %vm88 = vcmp.lt.s32.totalorder %v66, 4
    %v89 = vsel %vm85, %v69, %v72
    %v90 = vsel %vm88, %v78, 2102212464
    %v91 = vsel %vm87, %v75, %v90
    %v92 = vsel %vm86, %v89, %v91
    %v93 = vsel %vm85, %v72, %v75
    %v94 = vsel %vm88, %v81, 920167782
    %v95 = vsel %vm87, %v78, %v94
    %v96 = vsel %vm86, %v93, %v95
    %v97 = vsel %vm85, %v75, %v78
    %v98 = vsel %vm88, %v84, 1326507024
    %v99 = vsel %vm87, %v81, %v98
    %v100 = vsel %vm86, %v97, %v99
    %v101 = vshll.u32 %v61, 8
    %v102 = vmul.u32.u64.compose %v101, %v100
    %v103 = vextract.low.u32 %v102
    %v104 = vextract.high.u32 %v102
    %v105 = vmul.u32.u64.compose %v101, %v96
    %v106 = vextract.low.u32 %v105
    %v107 = vextract.high.u32 %v105
    %v108 = vmul.u32 %v101, %v92
    %v109 = vadd.s32 %v104, %v106
    %vm110 = vc.u32 %v104, %v106
    %v111 = vadd.s32 %v107, 1
    %v112 = vsel %vm110, %v111, %v107
    %v113 = vadd.s32 %v108, %v112
    %v114 = vadd.s32 %v113, 536870912
    %v115 = vshrl.u32 %v114, 30
    %v116 = vshll.u32 %v115, 30
    %v117 = vsub.s32 %v113, %v116
    %vm118 = vcmp.lt.s32.totalorder %v117, 0
    %v119 = vsub.s32 0, %v117
    %v120 = vsel %vm118, %v119, %v117
    %v121 = vclz %v120
    %v122 = vsub.s32 %v121, 2
    %vm123 = vcmp.gt.s32.totalorder 0, %v122
    %v124 = vsel %vm123, 0, %v122
    %v125 = vsub.s32 32, %v124
    %v126 = vshll.u32 %v117, %v124
    %v127 = vshrl.u32 %v109, %v125
    %v128 = vor.u32 %v126, %v127
    %v129 = vsub.s32 4294967266, %v124
    %v130 = vadd.s32 %v129, 127
    %v131 = vshll.u32 %v130, 23
    %v132 = vor.u32 4788187, %v131
    %v133 = vand.u32 2147483647, %v132
    %v135 = vcvt.s32.f32 %v128
    %v136 = vmul.f32 %v135, %v133
    %v137 = vxor.u32 %v136, 2147483648
    %v138 = vsel %vm55, %v137, %v136
    %v139 = vsub.s32 4, %v115
    %v140 = vsel %vm55, %v139, %v115
    %v141 = vsel %vm54, %v37, %v138
    %v142 = vsel %vm54, 0, %v140
    %v143 = vcosq.f32.pop %v141
    %v144 = vsinq.f32.pop %v141
    %vm145 = vweird.f32 %v37
    %v146 = vadd.s32 %v142, 3
    %v147 = vand.u32 %v146, 3
    %vm148 = vcmp.lt.s32.totalorder %v147, 2
    %vm149 = vcmp.eq.s32.totalorder %v147, 0
    %v150 = vxor.u32 %v144, 2147483648
    %v151 = vsel %vm149, %v143, %v150
    %vm152 = vcmp.eq.s32.totalorder %v147, 2
    %v153 = vxor.u32 %v143, 2147483648
    %v154 = vsel %vm152, %v153, %v144
    %v155 = vsel %vm148, %v151, %v154
    %v156 = vsel %vm145, nan, %v155
    %v157 = vand.u32 2147483647, %v37
    %vm158 = vcmp.le.f32.partialorder %v157, 0.7853982
    %vm159 = vcmp.lt.s32.totalorder %v37, 0
    %v160 = vand.u32 %v37, 2139095040
    %v161 = vshrl.u32 %v160, 23
    %v162 = vsub.s32 %v161, 127
    %v163 = vand.u32 2147483647, %v37
    %v164 = vand.u32 %v163, 8388607
    %v165 = vor.u32 %v164, 8388608
    %v166 = vsub.s32 0, %v165
    %v167 = vadd.s32 %v162, 1
    %vm168 = vcmp.gt.s32.totalorder %v167, 0
    %v169 = vsel %vm168, %v167, 0
    %v170 = vshrl.u32 %v169, 5
    %v171 = vand.u32 %v169, 31
    %v172 = vsub.s32 32, %v171
    %v173 = vshrl.u32 683565275, %v172
    %v174 = vshll.u32 683565275, %v171
    %v175 = vshrl.u32 2475754826, %v172
    %v176 = vor.u32 %v174, %v175
    %v177 = vshll.u32 2475754826, %v171
    %v178 = vshrl.u32 2131351028, %v172
    %v179 = vor.u32 %v177, %v178
    %v180 = vshll.u32 2131351028, %v171
    %v181 = vshrl.u32 2102212464, %v172
    %v182 = vor.u32 %v180, %v181
    %v183 = vshll.u32 2102212464, %v171
    %v184 = vshrl.u32 920167782, %v172
    %v185 = vor.u32 %v183, %v184
    %v186 = vshll.u32 920167782, %v171
    %v187 = vshrl.u32 1326507024, %v172
    %v188 = vor.u32 %v186, %v187
    %vm189 = vcmp.lt.s32.totalorder %v170, 1
    %vm190 = vcmp.lt.s32.totalorder %v170, 2
    %vm191 = vcmp.lt.s32.totalorder %v170, 3
    %vm192 = vcmp.lt.s32.totalorder %v170, 4
    %v193 = vsel %vm189, %v173, %v176
    %v194 = vsel %vm192, %v182, 2102212464
    %v195 = vsel %vm191, %v179, %v194
    %v196 = vsel %vm190, %v193, %v195
    %v197 = vsel %vm189, %v176, %v179
    %v198 = vsel %vm192, %v185, 920167782
    %v199 = vsel %vm191, %v182, %v198
    %v200 = vsel %vm190, %v197, %v199
    %v201 = vsel %vm189, %v179, %v182
    %v202 = vsel %vm192, %v188, 1326507024
    %v203 = vsel %vm191, %v185, %v202
    %v204 = vsel %vm190, %v201, %v203
    %v205 = vshll.u32 %v165, 8
    %v206 = vmul.u32.u64.compose %v205, %v204
    %v207 = vextract.low.u32 %v206
    %v208 = vextract.high.u32 %v206
    %v209 = vmul.u32.u64.compose %v205, %v200
    %v210 = vextract.low.u32 %v209
    %v211 = vextract.high.u32 %v209
    %v212 = vmul.u32 %v205, %v196
    %v213 = vadd.s32 %v208, %v210
    %vm214 = vc.u32 %v208, %v210
    %v215 = vadd.s32 %v211, 1
    %v216 = vsel %vm214, %v215, %v211
    %v217 = vadd.s32 %v212, %v216
    %v218 = vadd.s32 %v217, 536870912
    %v219 = vshrl.u32 %v218, 30
    %v220 = vshll.u32 %v219, 30
    %v221 = vsub.s32 %v217, %v220
    %vm222 = vcmp.lt.s32.totalorder %v221, 0
    %v223 = vsub.s32 0, %v221
    %v224 = vsel %vm222, %v223, %v221
    %v225 = vclz %v224
    %v226 = vsub.s32 %v225, 2
    %vm227 = vcmp.gt.s32.totalorder 0, %v226
    %v228 = vsel %vm227, 0, %v226
    %v229 = vsub.s32 32, %v228
    %v230 = vshll.u32 %v221, %v228
    %v231 = vshrl.u32 %v213, %v229
    %v232 = vor.u32 %v230, %v231
    %v233 = vsub.s32 4294967266, %v228
    %v234 = vadd.s32 %v233, 127
    %v235 = vshll.u32 %v234, 23
    %v236 = vor.u32 4788187, %v235
    %v237 = vand.u32 2147483647, %v236
    %v239 = vcvt.s32.f32 %v232
    %v240 = vmul.f32 %v239, %v237
    %v241 = vxor.u32 %v240, 2147483648
    %v242 = vsel %vm159, %v241, %v240
    %v243 = vsub.s32 4, %v219
    %v244 = vsel %vm159, %v243, %v219
    %v245 = vsel %vm158, %v37, %v242
    %v246 = vsel %vm158, 0, %v244
    %v247 = vcosq.f32.pop %v245
    %v248 = vsinq.f32.pop %v245
    %vm249 = vweird.f32 %v37
    %v250 = vand.u32 %v246, 3
    %vm251 = vcmp.lt.s32.totalorder %v250, 2
    %vm252 = vcmp.eq.s32.totalorder %v250, 0
    %v253 = vxor.u32 %v248, 2147483648
    %v254 = vsel %vm252, %v247, %v253
    %vm255 = vcmp.eq.s32.totalorder %v250, 2
    %v256 = vxor.u32 %v247, 2147483648
    %v257 = vsel %vm255, %v256, %v248
    %v258 = vsel %vm251, %v254, %v257
    %v259 = vsel %vm249, nan, %v258
    %v260 = vsel %vm52, %v156, %v259
    %v261 = vld [vmem:[#allocation2] sm:$0xff]
    %v262 = vadd.f32 %v261, %v260
    %vm263 = vcmask 523264
    %264 = vst.msk [vmem:[#allocation5] sm:$0xff] %vm263, %v262
    // Predicated region
    $region14: #{tpu_custom_call.1} parent=1 // pred_check
      _
    $region15: #{tpu_custom_call.1} parent=1 // pred_check_branch
      %266 = sbr.rel (0) target = $region17
    $region16: #{tpu_custom_call.1} parent=1 // pred_region
      %s268 = ssub.s32 128, 128
      %269 = vsyncadd [#allocation4], %s268
      %s271 = sshll.u32 [#allocation5], 4
      %s272 = int_to_ptr.vmem [resolvable:$true] %s271
      %274 = dma.vmem_to_hbm [thread:$0]  %s272, 128, %s2, [#allocation4]
    $region17: #{tpu_custom_call.1} parent=1 // pred_fallthru
      _
    // Predicated region
    $region18: #{tpu_custom_call.1} parent=1 // pred_check
      _
    $region19: #{tpu_custom_call.1} parent=1 // pred_check_branch
      %276 = sbr.rel (0) target = $region21
    $region20: #{tpu_custom_call.1} parent=1 // pred_region
      %277 = dma.done [#allocation4], 128
    $region21: #{tpu_custom_call.1} parent=1 // pred_fallthru
      _
    %278 = vsyncpa [#allocation3], 1
    %279 = vsyncpa [#allocation4], 1

</llo_original>
